<compile_context>
chip_gen: v7x
topology: tpu7x:2x2x1
jax: 0.10.0
libtpu: 0.0.40
codegen_flags: <defaults>
</compile_context>

<pallas_src>
import jax
import jax.numpy as jnp
from jax.experimental import pallas as pl
from jax.experimental.pallas import tpu as pltpu


# ---------------------------------------------------------------------------
# helpers
# ---------------------------------------------------------------------------
def _pick_tile(m, pref):
    """Largest divisor of m that is a multiple of 8 and <= pref (else m)."""
    if m <= pref:
        return m
    for t in range(pref, 7, -1):
        if m % t == 0 and t % 8 == 0:
            return t
    return m


def _upsample_matrix(l_in, scale):
    """(l_out, l_in) bilinear interpolation matrix, align_corners=True."""
    l_out = l_in * scale
    if l_in == 1:
        return jnp.ones((l_out, 1), dtype=jnp.float32)
    src = jnp.arange(l_out, dtype=jnp.float32) * (l_in - 1) / (l_out - 1)
    lo = jnp.clip(jnp.floor(src).astype(jnp.int32), 0, l_in - 2)
    frac = src - lo.astype(jnp.float32)
    rows = jnp.arange(l_out)
    mat = jnp.zeros((l_out, l_in), jnp.float32)
    mat = mat.at[rows, lo].set(1.0 - frac)
    mat = mat.at[rows, lo + 1].add(frac)
    return mat


def upsample_bilinear_nhwc(x, scale):
    """Bilinear upsample (align_corners=True), channels-last."""
    _, h, w, _ = x.shape
    a_h = _upsample_matrix(h, scale)
    a_w = _upsample_matrix(w, scale)
    y = jnp.einsum('oh,bhwc->bowc', a_h, x)
    y = jnp.einsum('pw,bowc->bopc', a_w, y)
    return y


def upsample_bilinear_nchw(x, scale):
    _, _, h, w = x.shape
    a_h = _upsample_matrix(h, scale)
    a_w = _upsample_matrix(w, scale)
    y = jnp.einsum('oh,bchw->bcow', a_h, x)
    y = jnp.einsum('pw,bcow->bcop', a_w, y)
    return y


# ---------------------------------------------------------------------------
# Kernel 1: 1x1 conv  (channels-last matmul + bias), tiled over M = B*H*W
# ---------------------------------------------------------------------------
def _conv1x1_kernel(x_ref, wt_ref, b_ref, o_ref):
    y = jnp.dot(x_ref[...], wt_ref[...], preferred_element_type=jnp.float32)
    o_ref[...] = (y + b_ref[...]).astype(o_ref.dtype)


def conv1x1(x_nchw, w, b, tm_pref=512):
    """x: (B, Cin, H, W), w: (Cout, Cin), b: (Cout,) -> (B, H, W, Cout)."""
    B, Cin, H, W = x_nchw.shape
    Cout = w.shape[0]
    M = B * H * W
    x = jnp.transpose(x_nchw, (0, 2, 3, 1)).reshape(M, Cin)
    wt = jnp.transpose(w)                        # (Cin, Cout)
    b2 = b.reshape(1, Cout)
    TM = _pick_tile(M, tm_pref)

    out = pl.pallas_call(
        _conv1x1_kernel,
        out_shape=jax.ShapeDtypeStruct((M, Cout), x.dtype),
        grid_spec=pltpu.PrefetchScalarGridSpec(
            num_scalar_prefetch=0,
            grid=(M // TM,),
            in_specs=[
                pl.BlockSpec((TM, Cin), lambda i: (i, 0)),
                pl.BlockSpec((Cin, Cout), lambda i: (0, 0)),
                pl.BlockSpec((1, Cout), lambda i: (0, 0)),
            ],
            out_specs=pl.BlockSpec((TM, Cout), lambda i: (i, 0)),
        ),
        compiler_params=pltpu.CompilerParams(
            dimension_semantics=("parallel",)),
    )(x, wt, b2)
    return out.reshape(B, H, W, Cout)


# ---------------------------------------------------------------------------
# Kernel 2: fused global avg + max pool (channels-last streaming reduction)
# ---------------------------------------------------------------------------
def avg_max_pool(x_nhwc, t_pref=2048):
    """x: (B, H, W, C) -> (B, 2, C) with row 0 = mean, row 1 = max."""
    B, H, W, C = x_nhwc.shape
    HW = H * W
    x = x_nhwc.reshape(B, HW, C)
    T = _pick_tile(HW, t_pref)
    n_t = HW // T
    inv_hw = 1.0 / float(HW)

    def kernel(x_ref, o_ref, sum_acc, max_acc):
        t = pl.program_id(1)

        @pl.when(t == 0)
        def _():
            sum_acc[...] = jnp.zeros_like(sum_acc)
            max_acc[...] = jnp.full_like(max_acc, -jnp.inf)

        x_tile = x_ref[0].astype(jnp.float32)                    # (T, C)
        sum_acc[...] += jnp.sum(x_tile, axis=0, keepdims=True)   # sublane reduce
        max_acc[...] = jnp.maximum(max_acc[...],
                                   jnp.max(x_tile, axis=0, keepdims=True))

        @pl.when(t == pl.num_programs(1) - 1)
        def _():
            avg_row = sum_acc[...] * inv_hw                      # (1, C)
            out = jnp.concatenate([avg_row, max_acc[...]], axis=0)  # (2, C)
            o_ref[0] = out.astype(o_ref.dtype)

    return pl.pallas_call(
        kernel,
        out_shape=jax.ShapeDtypeStruct((B, 2, C), x.dtype),
        grid_spec=pltpu.PrefetchScalarGridSpec(
            num_scalar_prefetch=0,
            grid=(B, n_t),
            in_specs=[pl.BlockSpec((1, T, C), lambda b, t: (b, t, 0))],
            out_specs=pl.BlockSpec((1, 2, C), lambda b, t: (b, 0, 0)),
            scratch_shapes=[pltpu.VMEM((1, C), jnp.float32),
                            pltpu.VMEM((1, C), jnp.float32)],
        ),
        compiler_params=pltpu.CompilerParams(
            dimension_semantics=("parallel", "arbitrary")),
    )(x)


# ---------------------------------------------------------------------------
# Kernel 3: head MLP  (Linear(768->128) then Linear(128->2), no activation)
# ---------------------------------------------------------------------------
def _head_kernel(v_ref, w1t_ref, b1_ref, w2t_ref, b2_ref, o_ref):
    h = jnp.dot(v_ref[...], w1t_ref[...],
                preferred_element_type=jnp.float32) + b1_ref[...]
    y = jnp.dot(h, w2t_ref[...],
                preferred_element_type=jnp.float32) + b2_ref[...]
    o_ref[...] = y.astype(o_ref.dtype)


def head_mlp(v, w1, b1, w2, b2):
    B, D = v.shape
    Hd = w1.shape[0]
    O = w2.shape[0]
    return pl.pallas_call(
        _head_kernel,
        out_shape=jax.ShapeDtypeStruct((B, O), v.dtype),
        grid_spec=pltpu.PrefetchScalarGridSpec(
            num_scalar_prefetch=0,
            grid=(1,),
            in_specs=[
                pl.BlockSpec((B, D), lambda i: (0, 0)),
                pl.BlockSpec((D, Hd), lambda i: (0, 0)),
                pl.BlockSpec((1, Hd), lambda i: (0, 0)),
                pl.BlockSpec((Hd, O), lambda i: (0, 0)),
                pl.BlockSpec((1, O), lambda i: (0, 0)),
            ],
            out_specs=pl.BlockSpec((B, O), lambda i: (0, 0)),
        ),
    )(v, jnp.transpose(w1), b1.reshape(1, Hd), jnp.transpose(w2),
      b2.reshape(1, O))


# ---------------------------------------------------------------------------
# Full forward
# ---------------------------------------------------------------------------
def siam_forward(feat3, feat4, feat5, params):
    c3 = conv1x1(feat3, params['w3'], params['b3'])          # (B, H, W, 128)
    c4 = conv1x1(feat4, params['w4'], params['b4'])          # (B, H/2, W/2, 128)
    c5 = conv1x1(feat5, params['w5'], params['b5'])          # (B, H/4, W/4, 128)
    u4 = upsample_bilinear_nhwc(c4, 2)                       # (B, H, W, 128)
    u5 = upsample_bilinear_nhwc(c5, 4)                       # (B, H, W, 128)

    # pooling of the channel-concat == per-feature pooling then concat
    p3 = avg_max_pool(c3)                                    # (B, 2, 128)
    p4 = avg_max_pool(u4)
    p5 = avg_max_pool(u5)

    avg = jnp.concatenate([p3[:, 0], p4[:, 0], p5[:, 0]], axis=-1)  # (B, 384)
    mx = jnp.concatenate([p3[:, 1], p4[:, 1], p5[:, 1]], axis=-1)   # (B, 384)
    v = jnp.concatenate([avg, mx], axis=-1)                          # (B, 768)

    return head_mlp(v, params['lw1'], params['lb1'],
                    params['lw2'], params['lb2'])             # (B, 2)


def siam_ref(feat3, feat4, feat5, params):
    """Pure-JAX reference matching the PyTorch forward."""
    hp = jax.lax.Precision.HIGHEST

    def conv(x, w, b):
        return jnp.einsum('bchw,oc->bohw', x, w, precision=hp) \
            + b[None, :, None, None]

    c3 = conv(feat3, params['w3'], params['b3'])
    c4 = conv(feat4, params['w4'], params['b4'])
    c5 = conv(feat5, params['w5'], params['b5'])
    u4 = upsample_bilinear_nchw(c4, 2)
    u5 = upsample_bilinear_nchw(c5, 4)
    feat = jnp.concatenate([c3, u4, u5], axis=1)             # (B, 384, H, W)
    avg = jnp.mean(feat, axis=(2, 3))
    mx = jnp.max(feat, axis=(2, 3))
    v = jnp.concatenate([avg, mx], axis=1)                   # (B, 768)
    h = jnp.dot(v, params['lw1'].T, precision=hp) + params['lb1']
    return jnp.dot(h, params['lw2'].T, precision=hp) + params['lb2']


if __name__ == "__main__":
    B = 2
    H, W = 16, 16                     # feat3 spatial; feat4 = /2, feat5 = /4

    key = jax.random.PRNGKey(0)
    keys = jax.random.split(key, 13)

    feat3 = jax.random.normal(keys[0], (B, 128, H, W), dtype=jnp.float32)
    feat4 = jax.random.normal(keys[1], (B, 256, H // 2, W // 2), dtype=jnp.float32)
    feat5 = jax.random.normal(keys[2], (B, 512, H // 4, W // 4), dtype=jnp.float32)

    s = 0.05
    params = {
        'w3': s * jax.random.normal(keys[3], (128, 128), dtype=jnp.float32),
        'b3': s * jax.random.normal(keys[4], (128,), dtype=jnp.float32),
        'w4': s * jax.random.normal(keys[5], (128, 256), dtype=jnp.float32),
        'b4': s * jax.random.normal(keys[6], (128,), dtype=jnp.float32),
        'w5': s * jax.random.normal(keys[7], (128, 512), dtype=jnp.float32),
        'b5': s * jax.random.normal(keys[8], (128,), dtype=jnp.float32),
        'lw1': s * jax.random.normal(keys[9], (128, 768), dtype=jnp.float32),
        'lb1': s * jax.random.normal(keys[10], (128,), dtype=jnp.float32),
        'lw2': s * jax.random.normal(keys[11], (2, 128), dtype=jnp.float32),
        'lb2': s * jax.random.normal(keys[12], (2,), dtype=jnp.float32),
    }

    out = siam_forward(feat3, feat4, feat5, params)
    out = jax.block_until_ready(out)

    ref = siam_ref(feat3, feat4, feat5, params)
    ref = jax.block_until_ready(ref)

    assert out.shape == (B, 2), out.shape
    max_err = float(jnp.max(jnp.abs(out - ref)))
    assert jnp.allclose(out, ref, atol=1e-2, rtol=1e-2), max_err

    print("KERNEL_OK")
</pallas_src>

<mosaic_0001>
module attributes {stable_mosaic.version = 11 : i64} {
  func.func @_conv1x1_kernel(%arg0: i32, %arg1: memref<512x128xf32, #tpu.memory_space<vmem>>, %arg2: memref<128x128xf32, #tpu.memory_space<vmem>>, %arg3: memref<1x128xf32, #tpu.memory_space<vmem>>, %arg4: memref<512x128xf32, #tpu.memory_space<vmem>>) attributes {dimension_semantics = [#tpu.dimension_semantics<parallel>], iteration_bounds = array<i64: 1>, scalar_prefetch = 0 : i64, scratch_operands = 0 : i64, tpu.core_type = #tpu.core_type<tc>, window_params = [{transform_indices = @transform_0, window_bounds = array<i64: 512, 128>}, {pipeline_mode = #tpu.pipeline_mode<synchronous>, transform_indices = @transform_1, window_bounds = array<i64: 128, 128>}, {pipeline_mode = #tpu.pipeline_mode<synchronous>, transform_indices = @transform_2, window_bounds = array<i64: 1, 128>}, {transform_indices = @transform_3, window_bounds = array<i64: 512, 128>}]} {
    %c0 = arith.constant 0 : index
    %c0_0 = arith.constant 0 : index
    %0 = vector.load %arg1[%c0, %c0_0] : memref<512x128xf32, #tpu.memory_space<vmem>>, vector<512x128xf32>
    %c0_1 = arith.constant 0 : index
    %c0_2 = arith.constant 0 : index
    %1 = vector.load %arg2[%c0_1, %c0_2] : memref<128x128xf32, #tpu.memory_space<vmem>>, vector<128x128xf32>
    %cst = arith.constant dense<0.000000e+00> : vector<512x128xf32>
    %2 = tpu.matmul %0, %1, %cst {dimension_numbers = #tpu.dot_dimension_numbers<[1], [0], [0], [1], [0, 0, 1, 1], [], []>} : vector<512x128xf32>, vector<128x128xf32>, vector<512x128xf32> -> vector<512x128xf32>
    %c0_3 = arith.constant 0 : index
    %c0_4 = arith.constant 0 : index
    %3 = vector.load %arg3[%c0_3, %c0_4] : memref<1x128xf32, #tpu.memory_space<vmem>>, vector<1x128xf32>
    %4 = vector.broadcast %3 : vector<1x128xf32> to vector<512x128xf32>
    %5 = arith.addf %2, %4 : vector<512x128xf32>
    %c0_5 = arith.constant 0 : index
    %c0_6 = arith.constant 0 : index
    %6 = vector.load %arg4[%c0_5, %c0_6] : memref<512x128xf32, #tpu.memory_space<vmem>>, vector<512x128xf32>
    tpu.vector_store %arg4[%c0_5, %c0_6], %5 {strides = array<i32>} : memref<512x128xf32, #tpu.memory_space<vmem>>, vector<512x128xf32>,
    return
  }
  func.func @transform_0(%arg0: i32) -> (i32, i32) {
    %c0_i32 = arith.constant 0 : i32
    %c0_i32_0 = arith.constant 0 : i32
    return %arg0, %c0_i32 : i32, i32
  }
  func.func @transform_1(%arg0: i32) -> (i32, i32) {
    %c0_i32 = arith.constant 0 : i32
    %c0_i32_0 = arith.constant 0 : i32
    %c0_i32_1 = arith.constant 0 : i32
    return %c0_i32, %c0_i32_0 : i32, i32
  }
  func.func @transform_2(%arg0: i32) -> (i32, i32) {
    %c0_i32 = arith.constant 0 : i32
    %c0_i32_0 = arith.constant 0 : i32
    %c0_i32_1 = arith.constant 0 : i32
    return %c0_i32, %c0_i32_0 : i32, i32
  }
  func.func @transform_3(%arg0: i32) -> (i32, i32) {
    %c0_i32 = arith.constant 0 : i32
    %c0_i32_0 = arith.constant 0 : i32
    return %arg0, %c0_i32 : i32, i32
  }
}

</mosaic_0001>

<llo_original>
// kernel: tpu_custom_call.1
$region0: #{tpu_custom_call.1}
  #allocation0 [shape = 'u32[]', space=smem, size = 0x4, offset = 0x4, fixed_abs, tag = 'smem constant byte address 0x4 - core index']
  #allocation1 [shape = 'u32[144,128]{1,0:T(1,128)}', space=vmem, size = 0x12000, scoped, tag = 'internal scratch']
  %s0 = inlined_call_operand.hbm [shape: f32[512,128], index: 0, kind: input, shape index: {}]
  %s1 = inlined_call_operand.hbm [shape: f32[128,128], index: 1, kind: input, shape index: {}]
  %s2 = inlined_call_operand.vmem [shape: f32[1,128], index: 2, kind: input, shape index: {}]
  %s3 = inlined_call_operand.hbm [shape: f32[512,128], index: 3, kind: output, shape index: {}]
  %s4 = sld [smem:[#allocation0]]
  $region30: #{tpu_custom_call.1} parent=0
    _
  %s6 = ssub.s32 1, %s4
  %s7 = scalar_select 0, %s6, %s4
  $region1: #{tpu_custom_call.1} parent=0
    #allocation2 [shape = 'u8[262144]{0}', space=vmem, size = 0x40000, scoped, tag = 'input window, operand 0, single buffered']
    #allocation3 [shape = 's32[1]{0}', space=sflag, size = 0x4, scoped, tag = 'scoped memory for tpu_custom_call.1']
    #allocation4 [shape = 's32[1]{0}', space=sflag, size = 0x4, scoped, tag = 'scoped memory for tpu_custom_call.1']
    #allocation5 [shape = 'u8[65536]{0}', space=vmem, size = 0x10000, scoped, tag = 'input window, operand 1, single buffered']
    #allocation6 [shape = 's32[1]{0}', space=sflag, size = 0x4, scoped, tag = 'scoped memory for tpu_custom_call.1']
    #allocation7 [shape = 'u8[262144]{0}', space=vmem, size = 0x40000, scoped, tag = 'output window, operand 0, single buffered']
    %8 = vsyncpa [#allocation3], 0
    %9 = vsyncpa [#allocation6], 0
    %10 = vsyncpa [#allocation4], 0
    // Predicated region
    $region2: #{tpu_custom_call.1} parent=1 // pred_check
      _
    $region3: #{tpu_custom_call.1} parent=1 // pred_check_branch
      %12 = sbr.rel (0) target = $region5
    $region4: #{tpu_custom_call.1} parent=1 // pred_region
      %s14 = ssub.s32 8192, 8192
      %15 = vsyncadd [#allocation3], %s14
      %s16 = sshll.u32 [#allocation2], 4
      %s17 = int_to_ptr.vmem [resolvable:$true] %s16
      %22 = dma.hbm_to_vmem [thread:$0]  %s0, 8192, %s17, [#allocation3], 128, 128, 8
    $region5: #{tpu_custom_call.1} parent=1 // pred_fallthru
      _
    // Predicated region
    $region6: #{tpu_custom_call.1} parent=1 // pred_check
      _
    $region7: #{tpu_custom_call.1} parent=1 // pred_check_branch
      %24 = sbr.rel (0) target = $region9
    $region8: #{tpu_custom_call.1} parent=1 // pred_region
      %s26 = ssub.s32 2048, 2048
      %27 = vsyncadd [#allocation6], %s26
      %s28 = sshll.u32 [#allocation5], 4
      %s29 = int_to_ptr.vmem [resolvable:$true] %s28
      %34 = dma.hbm_to_vmem [thread:$0]  %s1, 2048, %s29, [#allocation6], 128, 128, 8
    $region9: #{tpu_custom_call.1} parent=1 // pred_fallthru
      _
    // Predicated region
    $region10: #{tpu_custom_call.1} parent=1 // pred_check
      _
    $region11: #{tpu_custom_call.1} parent=1 // pred_check_branch
      %36 = sbr.rel (0) target = $region13
    $region12: #{tpu_custom_call.1} parent=1 // pred_region
      _
    $region13: #{tpu_custom_call.1} parent=1 // pred_fallthru
      _
    // Predicated region
    $region14: #{tpu_custom_call.1} parent=1 // pred_check
      _
    $region15: #{tpu_custom_call.1} parent=1 // pred_check_branch
      %38 = sbr.rel (0) target = $region17
    $region16: #{tpu_custom_call.1} parent=1 // pred_region
      %39 = dma.done [#allocation3], 8192
    $region17: #{tpu_custom_call.1} parent=1 // pred_fallthru
      _
    // Predicated region
    $region18: #{tpu_custom_call.1} parent=1 // pred_check
      _
    $region19: #{tpu_custom_call.1} parent=1 // pred_check_branch
      %41 = sbr.rel (0) target = $region21
    $region20: #{tpu_custom_call.1} parent=1 // pred_region
      %42 = dma.done [#allocation6], 2048
    $region21: #{tpu_custom_call.1} parent=1 // pred_fallthru
      _
    %v43 = vld [vmem:[#allocation2] sm:$0xff]
    %v44 = vld [vmem:[#allocation2 + $0x8] sm:$0xff]
    %v45 = vld [vmem:[#allocation2 + $0x10] sm:$0xff]
    %v46 = vld [vmem:[#allocation2 + $0x18] sm:$0xff]
    %v47 = vld [vmem:[#allocation2 + $0x20] sm:$0xff]
    %v48 = vld [vmem:[#allocation2 + $0x28] sm:$0xff]
    %v49 = vld [vmem:[#allocation2 + $0x30] sm:$0xff]
    %v50 = vld [vmem:[#allocation2 + $0x38] sm:$0xff]
    %v51 = vld [vmem:[#allocation2 + $0x40] sm:$0xff]
    %v52 = vld [vmem:[#allocation2 + $0x48] sm:$0xff]
    %v53 = vld [vmem:[#allocation2 + $0x50] sm:$0xff]
    %v54 = vld [vmem:[#allocation2 + $0x58] sm:$0xff]
    %v55 = vld [vmem:[#allocation2 + $0x60] sm:$0xff]
    %v56 = vld [vmem:[#allocation2 + $0x68] sm:$0xff]
    %v57 = vld [vmem:[#allocation2 + $0x70] sm:$0xff]
    %v58 = vld [vmem:[#allocation2 + $0x78] sm:$0xff]
    %v59 = vld [vmem:[#allocation2 + $0x80] sm:$0xff]
    %v60 = vld [vmem:[#allocation2 + $0x88] sm:$0xff]
    %v61 = vld [vmem:[#allocation2 + $0x90] sm:$0xff]
    %v62 = vld [vmem:[#allocation2 + $0x98] sm:$0xff]
    %v63 = vld [vmem:[#allocation2 + $0xa0] sm:$0xff]
    %v64 = vld [vmem:[#allocation2 + $0xa8] sm:$0xff]
    %v65 = vld [vmem:[#allocation2 + $0xb0] sm:$0xff]
    %v66 = vld [vmem:[#allocation2 + $0xb8] sm:$0xff]
    %v67 = vld [vmem:[#allocation2 + $0xc0] sm:$0xff]
    %v68 = vld [vmem:[#allocation2 + $0xc8] sm:$0xff]
    %v69 = vld [vmem:[#allocation2 + $0xd0] sm:$0xff]
    %v70 = vld [vmem:[#allocation2 + $0xd8] sm:$0xff]
    %v71 = vld [vmem:[#allocation2 + $0xe0] sm:$0xff]
    %v72 = vld [vmem:[#allocation2 + $0xe8] sm:$0xff]
    %v73 = vld [vmem:[#allocation2 + $0xf0] sm:$0xff]
    %v74 = vld [vmem:[#allocation2 + $0xf8] sm:$0xff]
    %v75 = vld [vmem:[#allocation2 + $0x100] sm:$0xff]
    %v76 = vld [vmem:[#allocation2 + $0x108] sm:$0xff]
    %v77 = vld [vmem:[#allocation2 + $0x110] sm:$0xff]
    %v78 = vld [vmem:[#allocation2 + $0x118] sm:$0xff]
    %v79 = vld [vmem:[#allocation2 + $0x120] sm:$0xff]
    %v80 = vld [vmem:[#allocation2 + $0x128] sm:$0xff]
    %v81 = vld [vmem:[#allocation2 + $0x130] sm:$0xff]
    %v82 = vld [vmem:[#allocation2 + $0x138] sm:$0xff]
    %v83 = vld [vmem:[#allocation2 + $0x140] sm:$0xff]
    %v84 = vld [vmem:[#allocation2 + $0x148] sm:$0xff]
    %v85 = vld [vmem:[#allocation2 + $0x150] sm:$0xff]
    %v86 = vld [vmem:[#allocation2 + $0x158] sm:$0xff]
    %v87 = vld [vmem:[#allocation2 + $0x160] sm:$0xff]
    %v88 = vld [vmem:[#allocation2 + $0x168] sm:$0xff]
    %v89 = vld [vmem:[#allocation2 + $0x170] sm:$0xff]
    %v90 = vld [vmem:[#allocation2 + $0x178] sm:$0xff]
    %v91 = vld [vmem:[#allocation2 + $0x180] sm:$0xff]
    %v92 = vld [vmem:[#allocation2 + $0x188] sm:$0xff]
    %v93 = vld [vmem:[#allocation2 + $0x190] sm:$0xff]
    %v94 = vld [vmem:[#allocation2 + $0x198] sm:$0xff]
    %v95 = vld [vmem:[#allocation2 + $0x1a0] sm:$0xff]
    %v96 = vld [vmem:[#allocation2 + $0x1a8] sm:$0xff]
    %v97 = vld [vmem:[#allocation2 + $0x1b0] sm:$0xff]
    %v98 = vld [vmem:[#allocation2 + $0x1b8] sm:$0xff]
    %v99 = vld [vmem:[#allocation2 + $0x1c0] sm:$0xff]
    %v100 = vld [vmem:[#allocation2 + $0x1c8] sm:$0xff]
    %v101 = vld [vmem:[#allocation2 + $0x1d0] sm:$0xff]
    %v102 = vld [vmem:[#allocation2 + $0x1d8] sm:$0xff]
    %v103 = vld [vmem:[#allocation2 + $0x1e0] sm:$0xff]
    %v104 = vld [vmem:[#allocation2 + $0x1e8] sm:$0xff]
    %v105 = vld [vmem:[#allocation2 + $0x1f0] sm:$0xff]
    %v106 = vld [vmem:[#allocation2 + $0x1f8] sm:$0xff]
    %v107 = vld [vmem:[#allocation5] sm:$0xff]
    %v108 = vld [vmem:[#allocation5 + $0x8] sm:$0xff]
    %v109 = vld [vmem:[#allocation5 + $0x10] sm:$0xff]
    %v110 = vld [vmem:[#allocation5 + $0x18] sm:$0xff]
    %v111 = vld [vmem:[#allocation5 + $0x20] sm:$0xff]
    %v112 = vld [vmem:[#allocation5 + $0x28] sm:$0xff]
    %v113 = vld [vmem:[#allocation5 + $0x30] sm:$0xff]
    %v114 = vld [vmem:[#allocation5 + $0x38] sm:$0xff]
    %v115 = vld [vmem:[#allocation5 + $0x40] sm:$0xff]
    %v116 = vld [vmem:[#allocation5 + $0x48] sm:$0xff]
    %v117 = vld [vmem:[#allocation5 + $0x50] sm:$0xff]
    %v118 = vld [vmem:[#allocation5 + $0x58] sm:$0xff]
    %v119 = vld [vmem:[#allocation5 + $0x60] sm:$0xff]
    %v120 = vld [vmem:[#allocation5 + $0x68] sm:$0xff]
    %v121 = vld [vmem:[#allocation5 + $0x70] sm:$0xff]
    %v122 = vld [vmem:[#allocation5 + $0x78] sm:$0xff]
    %v123 = vld [vmem:[%s2] sm:$0x1]
    %v125 = vlaneseq
    %v126 = vshrl.u32 %v125, 7
    %v127 = vsub.s32 0, %v126
    %v128 = vrot.slane %v123, %v127
    %130 = vmatprep.subr.mxu0 0.0
    %131 = vmatpush1.msra.mxu0 %v107
    %132 = vmatprep.subr.mxu0 0.0
    %133 = vmatpush1.msra.mxu0 %v108
    %134 = vmatprep.subr.mxu0 0.0
    %135 = vmatpush1.msra.mxu0 %v109
    %136 = vmatprep.subr.mxu0 0.0
    %137 = vmatpush1.msra.mxu0 %v110
    %138 = vmatprep.subr.mxu0 0.0
    %139 = vmatpush1.msra.mxu0 %v111
    %140 = vmatprep.subr.mxu0 0.0
    %141 = vmatpush1.msra.mxu0 %v112
    %142 = vmatprep.subr.mxu0 0.0
    %143 = vmatpush1.msra.mxu0 %v113
    %144 = vmatprep.subr.mxu0 0.0
    %145 = vmatpush1.msra.mxu0 %v114
    %146 = vmatprep.subr.mxu0 0.0
    %147 = vmatpush1.msra.mxu0 %v115
    %148 = vmatprep.subr.mxu0 0.0
    %149 = vmatpush1.msra.mxu0 %v116
    %150 = vmatprep.subr.mxu0 0.0
    %151 = vmatpush1.msra.mxu0 %v117
    %152 = vmatprep.subr.mxu0 0.0
    %153 = vmatpush1.msra.mxu0 %v118
    %154 = vmatprep.subr.mxu0 0.0
    %155 = vmatpush1.msra.mxu0 %v119
    %156 = vmatprep.subr.mxu0 0.0
    %157 = vmatpush1.msra.mxu0 %v120
    %158 = vmatprep.subr.mxu0 0.0
    %159 = vmatpush1.msra.mxu0 %v121
    %160 = vmatprep.subr.mxu0 0.0
    %161 = vmatpush1.msra.mxu0 %v122
    %162 = vmatprep.subr.mxu0 0.0
    %163 = vmatpush1.msra.mxu0 0.0
    %164 = vmatprep.subr.mxu0 0.0
    %165 = vmatpush1.msra.mxu0 0.0
    %166 = vmatprep.subr.mxu0 0.0
    %167 = vmatpush1.msra.mxu0 0.0
    %168 = vmatprep.subr.mxu0 0.0
    %169 = vmatpush1.msra.mxu0 0.0
    %170 = vmatprep.subr.mxu0 0.0
    %171 = vmatpush1.msra.mxu0 0.0
    %172 = vmatprep.subr.mxu0 0.0
    %173 = vmatpush1.msra.mxu0 0.0
    %174 = vmatprep.subr.mxu0 0.0
    %175 = vmatpush1.msra.mxu0 0.0
    %176 = vmatprep.subr.mxu0 0.0
    %177 = vmatpush1.msra.mxu0 0.0
    %178 = vmatprep.subr.mxu0 0.0
    %179 = vmatpush1.msra.mxu0 0.0
    %180 = vmatprep.subr.mxu0 0.0
    %181 = vmatpush1.msra.mxu0 0.0
    %182 = vmatprep.subr.mxu0 0.0
    %183 = vmatpush1.msra.mxu0 0.0
    %184 = vmatprep.subr.mxu0 0.0
    %185 = vmatpush1.msra.mxu0 0.0
    %186 = vmatprep.subr.mxu0 0.0
    %187 = vmatpush1.msra.mxu0 0.0
    %188 = vmatprep.subr.mxu0 0.0
    %189 = vmatpush1.msra.mxu0 0.0
    %190 = vmatprep.subr.mxu0 0.0
    %191 = vmatpush1.msra.mxu0 0.0
    %192 = vmatprep.subr.mxu0 0.0
    %193 = vmatpush1.msra.mxu0 0.0
    %194 = vmatprep.mubr.f32.mxu0 0.0
    %195 = vmatmul.mubr.f32.gmra.mrb[0].mxu0 %v43
    %v196 = vpop.f32.mrb[0].mxu0
    %v197 = vadd.f32 %v128, %v196
    %v198 = vpop.f32.mrb[0].mxu0
    %199 = vmatprep.mubr.f32.mxu0 0.0
    %200 = vmatmul.mubr.f32.gmra.mrb[0].mxu0 %v44
    %v201 = vpop.f32.mrb[0].mxu0
    %v202 = vadd.f32 %v128, %v201
    %v203 = vpop.f32.mrb[0].mxu0
    %204 = vmatprep.mubr.f32.mxu0 0.0
    %205 = vmatmul.mubr.f32.gmra.mrb[0].mxu0 %v45
    %v206 = vpop.f32.mrb[0].mxu0
    %v207 = vadd.f32 %v128, %v206
    %v208 = vpop.f32.mrb[0].mxu0
    %209 = vmatprep.mubr.f32.mxu0 0.0
    %210 = vmatmul.mubr.f32.gmra.mrb[0].mxu0 %v46
    %v211 = vpop.f32.mrb[0].mxu0
    %v212 = vadd.f32 %v128, %v211
    %v213 = vpop.f32.mrb[0].mxu0
    %214 = vmatprep.mubr.f32.mxu0 0.0
    %215 = vmatmul.mubr.f32.gmra.mrb[0].mxu0 %v47
    %v216 = vpop.f32.mrb[0].mxu0
    %v217 = vadd.f32 %v128, %v216
    %v218 = vpop.f32.mrb[0].mxu0
    %219 = vmatprep.mubr.f32.mxu0 0.0
    %220 = vmatmul.mubr.f32.gmra.mrb[0].mxu0 %v48
    %v221 = vpop.f32.mrb[0].mxu0
    %v222 = vadd.f32 %v128, %v221
    %v223 = vpop.f32.mrb[0].mxu0
    %224 = vmatprep.mubr.f32.mxu0 0.0
    %225 = vmatmul.mubr.f32.gmra.mrb[0].mxu0 %v49
    %v226 = vpop.f32.mrb[0].mxu0
    %v227 = vadd.f32 %v128, %v226
    %v228 = vpop.f32.mrb[0].mxu0
    %229 = vmatprep.mubr.f32.mxu0 0.0
    %230 = vmatmul.mubr.f32.gmra.mrb[0].mxu0 %v50
    %v231 = vpop.f32.mrb[0].mxu0
    %v232 = vadd.f32 %v128, %v231
    %v233 = vpop.f32.mrb[0].mxu0
    %234 = vmatprep.mubr.f32.mxu0 0.0
    %235 = vmatmul.mubr.f32.gmra.mrb[0].mxu0 %v51
    %v236 = vpop.f32.mrb[0].mxu0
    %v237 = vadd.f32 %v128, %v236
    %v238 = vpop.f32.mrb[0].mxu0
    %239 = vmatprep.mubr.f32.mxu0 0.0
    %240 = vmatmul.mubr.f32.gmra.mrb[0].mxu0 %v52
    %v241 = vpop.f32.mrb[0].mxu0
    %v242 = vadd.f32 %v128, %v241
    %v243 = vpop.f32.mrb[0].mxu0
    %244 = vmatprep.mubr.f32.mxu0 0.0
    %245 = vmatmul.mubr.f32.gmra.mrb[0].mxu0 %v53
    %v246 = vpop.f32.mrb[0].mxu0
    %v247 = vadd.f32 %v128, %v246
    %v248 = vpop.f32.mrb[0].mxu0
    %249 = vmatprep.mubr.f32.mxu0 0.0
    %250 = vmatmul.mubr.f32.gmra.mrb[0].mxu0 %v54
    %v251 = vpop.f32.mrb[0].mxu0
    %v252 = vadd.f32 %v128, %v251
    %v253 = vpop.f32.mrb[0].mxu0
    %254 = vmatprep.mubr.f32.mxu0 0.0
    %255 = vmatmul.mubr.f32.gmra.mrb[0].mxu0 %v55
    %v256 = vpop.f32.mrb[0].mxu0
    %v257 = vadd.f32 %v128, %v256
    %v258 = vpop.f32.mrb[0].mxu0
    %259 = vmatprep.mubr.f32.mxu0 0.0
    %260 = vmatmul.mubr.f32.gmra.mrb[0].mxu0 %v56
    %v261 = vpop.f32.mrb[0].mxu0
    %v262 = vadd.f32 %v128, %v261
    %v263 = vpop.f32.mrb[0].mxu0
    %264 = vmatprep.mubr.f32.mxu0 0.0
    %265 = vmatmul.mubr.f32.gmra.mrb[0].mxu0 %v57
    %v266 = vpop.f32.mrb[0].mxu0
    %v267 = vadd.f32 %v128, %v266
    %v268 = vpop.f32.mrb[0].mxu0
    %269 = vmatprep.mubr.f32.mxu0 0.0
    %270 = vmatmul.mubr.f32.gmra.mrb[0].mxu0 %v58
    %v271 = vpop.f32.mrb[0].mxu0
    %v272 = vadd.f32 %v128, %v271
    %v273 = vpop.f32.mrb[0].mxu0
    %274 = vmatprep.mubr.f32.mxu0 0.0
    %275 = vmatmul.mubr.f32.gmra.mrb[0].mxu0 %v59
    %v276 = vpop.f32.mrb[0].mxu0
    %v277 = vadd.f32 %v128, %v276
    %v278 = vpop.f32.mrb[0].mxu0
    %279 = vmatprep.mubr.f32.mxu0 0.0
    %280 = vmatmul.mubr.f32.gmra.mrb[0].mxu0 %v60
    %v281 = vpop.f32.mrb[0].mxu0
    %v282 = vadd.f32 %v128, %v281
    %v283 = vpop.f32.mrb[0].mxu0
    %284 = vmatprep.mubr.f32.mxu0 0.0
    %285 = vmatmul.mubr.f32.gmra.mrb[0].mxu0 %v61
    %v286 = vpop.f32.mrb[0].mxu0
    %v287 = vadd.f32 %v128, %v286
    %v288 = vpop.f32.mrb[0].mxu0
    %289 = vmatprep.mubr.f32.mxu0 0.0
    %290 = vmatmul.mubr.f32.gmra.mrb[0].mxu0 %v62
    %v291 = vpop.f32.mrb[0].mxu0
    %v292 = vadd.f32 %v128, %v291
    %v293 = vpop.f32.mrb[0].mxu0
    %294 = vmatprep.mubr.f32.mxu0 0.0
    %295 = vmatmul.mubr.f32.gmra.mrb[0].mxu0 %v63
    %v296 = vpop.f32.mrb[0].mxu0
    %v297 = vadd.f32 %v128, %v296
    %v298 = vpop.f32.mrb[0].mxu0
    %299 = vmatprep.mubr.f32.mxu0 0.0
    %300 = vmatmul.mubr.f32.gmra.mrb[0].mxu0 %v64
    %v301 = vpop.f32.mrb[0].mxu0
    %v302 = vadd.f32 %v128, %v301
    %v303 = vpop.f32.mrb[0].mxu0
    %304 = vmatprep.mubr.f32.mxu0 0.0
    %305 = vmatmul.mubr.f32.gmra.mrb[0].mxu0 %v65
    %v306 = vpop.f32.mrb[0].mxu0
    %v307 = vadd.f32 %v128, %v306
    %v308 = vpop.f32.mrb[0].mxu0
    %309 = vmatprep.mubr.f32.mxu0 0.0
    %310 = vmatmul.mubr.f32.gmra.mrb[0].mxu0 %v66
    %v311 = vpop.f32.mrb[0].mxu0
    %v312 = vadd.f32 %v128, %v311
    %v313 = vpop.f32.mrb[0].mxu0
    %314 = vmatprep.mubr.f32.mxu0 0.0
    %315 = vmatmul.mubr.f32.gmra.mrb[0].mxu0 %v67
    %v316 = vpop.f32.mrb[0].mxu0
    %v317 = vadd.f32 %v128, %v316
    %v318 = vpop.f32.mrb[0].mxu0
    %319 = vmatprep.mubr.f32.mxu0 0.0
    %320 = vmatmul.mubr.f32.gmra.mrb[0].mxu0 %v68
    %v321 = vpop.f32.mrb[0].mxu0
    %v322 = vadd.f32 %v128, %v321
    %v323 = vpop.f32.mrb[0].mxu0
    %324 = vmatprep.mubr.f32.mxu0 0.0
    %325 = vmatmul.mubr.f32.gmra.mrb[0].mxu0 %v69
    %v326 = vpop.f32.mrb[0].mxu0
    %v327 = vadd.f32 %v128, %v326
    %v328 = vpop.f32.mrb[0].mxu0
    %329 = vmatprep.mubr.f32.mxu0 0.0
    %330 = vmatmul.mubr.f32.gmra.mrb[0].mxu0 %v70
    %v331 = vpop.f32.mrb[0].mxu0
    %v332 = vadd.f32 %v128, %v331
    %v333 = vpop.f32.mrb[0].mxu0
    %334 = vmatprep.mubr.f32.mxu0 0.0
    %335 = vmatmul.mubr.f32.gmra.mrb[0].mxu0 %v71
    %v336 = vpop.f32.mrb[0].mxu0
    %v337 = vadd.f32 %v128, %v336
    %v338 = vpop.f32.mrb[0].mxu0
    %339 = vmatprep.mubr.f32.mxu0 0.0
    %340 = vmatmul.mubr.f32.gmra.mrb[0].mxu0 %v72
    %v341 = vpop.f32.mrb[0].mxu0
    %v342 = vadd.f32 %v128, %v341
    %v343 = vpop.f32.mrb[0].mxu0
    %344 = vmatprep.mubr.f32.mxu0 0.0
    %345 = vmatmul.mubr.f32.gmra.mrb[0].mxu0 %v73
    %v346 = vpop.f32.mrb[0].mxu0
    %v347 = vadd.f32 %v128, %v346
    %v348 = vpop.f32.mrb[0].mxu0
    %349 = vmatprep.mubr.f32.mxu0 0.0
    %350 = vmatmul.mubr.f32.gmra.mrb[0].mxu0 %v74
    %v351 = vpop.f32.mrb[0].mxu0
    %v352 = vadd.f32 %v128, %v351
    %v353 = vpop.f32.mrb[0].mxu0
    %354 = vmatprep.mubr.f32.mxu0 0.0
    %355 = vmatmul.mubr.f32.gmra.mrb[0].mxu0 %v75
    %v356 = vpop.f32.mrb[0].mxu0
    %v357 = vadd.f32 %v128, %v356
    %v358 = vpop.f32.mrb[0].mxu0
    %359 = vmatprep.mubr.f32.mxu0 0.0
    %360 = vmatmul.mubr.f32.gmra.mrb[0].mxu0 %v76
    %v361 = vpop.f32.mrb[0].mxu0
    %v362 = vadd.f32 %v128, %v361
    %v363 = vpop.f32.mrb[0].mxu0
    %364 = vmatprep.mubr.f32.mxu0 0.0
    %365 = vmatmul.mubr.f32.gmra.mrb[0].mxu0 %v77
    %v366 = vpop.f32.mrb[0].mxu0
    %v367 = vadd.f32 %v128, %v366
    %v368 = vpop.f32.mrb[0].mxu0
    %369 = vmatprep.mubr.f32.mxu0 0.0
    %370 = vmatmul.mubr.f32.gmra.mrb[0].mxu0 %v78
    %v371 = vpop.f32.mrb[0].mxu0
    %v372 = vadd.f32 %v128, %v371
    %v373 = vpop.f32.mrb[0].mxu0
    %374 = vmatprep.mubr.f32.mxu0 0.0
    %375 = vmatmul.mubr.f32.gmra.mrb[0].mxu0 %v79
    %v376 = vpop.f32.mrb[0].mxu0
    %v377 = vadd.f32 %v128, %v376
    %v378 = vpop.f32.mrb[0].mxu0
    %379 = vmatprep.mubr.f32.mxu0 0.0
    %380 = vmatmul.mubr.f32.gmra.mrb[0].mxu0 %v80
    %v381 = vpop.f32.mrb[0].mxu0
    %v382 = vadd.f32 %v128, %v381
    %v383 = vpop.f32.mrb[0].mxu0
    %384 = vmatprep.mubr.f32.mxu0 0.0
    %385 = vmatmul.mubr.f32.gmra.mrb[0].mxu0 %v81
    %v386 = vpop.f32.mrb[0].mxu0
    %v387 = vadd.f32 %v128, %v386
    %v388 = vpop.f32.mrb[0].mxu0
    %389 = vmatprep.mubr.f32.mxu0 0.0
    %390 = vmatmul.mubr.f32.gmra.mrb[0].mxu0 %v82
    %v391 = vpop.f32.mrb[0].mxu0
    %v392 = vadd.f32 %v128, %v391
    %v393 = vpop.f32.mrb[0].mxu0
    %394 = vmatprep.mubr.f32.mxu0 0.0
    %395 = vmatmul.mubr.f32.gmra.mrb[0].mxu0 %v83
    %v396 = vpop.f32.mrb[0].mxu0
    %v397 = vadd.f32 %v128, %v396
    %v398 = vpop.f32.mrb[0].mxu0
    %399 = vmatprep.mubr.f32.mxu0 0.0
    %400 = vmatmul.mubr.f32.gmra.mrb[0].mxu0 %v84
    %v401 = vpop.f32.mrb[0].mxu0
    %v402 = vadd.f32 %v128, %v401
    %v403 = vpop.f32.mrb[0].mxu0
    %404 = vmatprep.mubr.f32.mxu0 0.0
    %405 = vmatmul.mubr.f32.gmra.mrb[0].mxu0 %v85
    %v406 = vpop.f32.mrb[0].mxu0
    %v407 = vadd.f32 %v128, %v406
    %v408 = vpop.f32.mrb[0].mxu0
    %409 = vmatprep.mubr.f32.mxu0 0.0
    %410 = vmatmul.mubr.f32.gmra.mrb[0].mxu0 %v86
    %v411 = vpop.f32.mrb[0].mxu0
    %v412 = vadd.f32 %v128, %v411
    %v413 = vpop.f32.mrb[0].mxu0
    %414 = vmatprep.mubr.f32.mxu0 0.0
    %415 = vmatmul.mubr.f32.gmra.mrb[0].mxu0 %v87
    %v416 = vpop.f32.mrb[0].mxu0
    %v417 = vadd.f32 %v128, %v416
    %v418 = vpop.f32.mrb[0].mxu0
    %419 = vmatprep.mubr.f32.mxu0 0.0
    %420 = vmatmul.mubr.f32.gmra.mrb[0].mxu0 %v88
    %v421 = vpop.f32.mrb[0].mxu0
    %v422 = vadd.f32 %v128, %v421
    %v423 = vpop.f32.mrb[0].mxu0
    %424 = vmatprep.mubr.f32.mxu0 0.0
    %425 = vmatmul.mubr.f32.gmra.mrb[0].mxu0 %v89
    %v426 = vpop.f32.mrb[0].mxu0
    %v427 = vadd.f32 %v128, %v426
    %v428 = vpop.f32.mrb[0].mxu0
    %429 = vmatprep.mubr.f32.mxu0 0.0
    %430 = vmatmul.mubr.f32.gmra.mrb[0].mxu0 %v90
    %v431 = vpop.f32.mrb[0].mxu0
    %v432 = vadd.f32 %v128, %v431
    %v433 = vpop.f32.mrb[0].mxu0
    %434 = vmatprep.mubr.f32.mxu0 0.0
    %435 = vmatmul.mubr.f32.gmra.mrb[0].mxu0 %v91
    %v436 = vpop.f32.mrb[0].mxu0
    %v437 = vadd.f32 %v128, %v436
    %v438 = vpop.f32.mrb[0].mxu0
    %439 = vmatprep.mubr.f32.mxu0 0.0
    %440 = vmatmul.mubr.f32.gmra.mrb[0].mxu0 %v92
    %v441 = vpop.f32.mrb[0].mxu0
    %v442 = vadd.f32 %v128, %v441
    %v443 = vpop.f32.mrb[0].mxu0
    %444 = vmatprep.mubr.f32.mxu0 0.0
    %445 = vmatmul.mubr.f32.gmra.mrb[0].mxu0 %v93
    %v446 = vpop.f32.mrb[0].mxu0
    %v447 = vadd.f32 %v128, %v446
    %v448 = vpop.f32.mrb[0].mxu0
    %449 = vmatprep.mubr.f32.mxu0 0.0
    %450 = vmatmul.mubr.f32.gmra.mrb[0].mxu0 %v94
    %v451 = vpop.f32.mrb[0].mxu0
    %v452 = vadd.f32 %v128, %v451
    %v453 = vpop.f32.mrb[0].mxu0
    %454 = vmatprep.mubr.f32.mxu0 0.0
    %455 = vmatmul.mubr.f32.gmra.mrb[0].mxu0 %v95
    %v456 = vpop.f32.mrb[0].mxu0
    %v457 = vadd.f32 %v128, %v456
    %v458 = vpop.f32.mrb[0].mxu0
    %459 = vmatprep.mubr.f32.mxu0 0.0
    %460 = vmatmul.mubr.f32.gmra.mrb[0].mxu0 %v96
    %v461 = vpop.f32.mrb[0].mxu0
    %v462 = vadd.f32 %v128, %v461
    %v463 = vpop.f32.mrb[0].mxu0
    %464 = vmatprep.mubr.f32.mxu0 0.0
    %465 = vmatmul.mubr.f32.gmra.mrb[0].mxu0 %v97
    %v466 = vpop.f32.mrb[0].mxu0
    %v467 = vadd.f32 %v128, %v466
    %v468 = vpop.f32.mrb[0].mxu0
    %469 = vmatprep.mubr.f32.mxu0 0.0
    %470 = vmatmul.mubr.f32.gmra.mrb[0].mxu0 %v98
    %v471 = vpop.f32.mrb[0].mxu0
    %v472 = vadd.f32 %v128, %v471
    %v473 = vpop.f32.mrb[0].mxu0
    %474 = vmatprep.mubr.f32.mxu0 0.0
    %475 = vmatmul.mubr.f32.gmra.mrb[0].mxu0 %v99
    %v476 = vpop.f32.mrb[0].mxu0
    %v477 = vadd.f32 %v128, %v476
    %v478 = vpop.f32.mrb[0].mxu0
    %479 = vmatprep.mubr.f32.mxu0 0.0
    %480 = vmatmul.mubr.f32.gmra.mrb[0].mxu0 %v100
    %v481 = vpop.f32.mrb[0].mxu0
    %v482 = vadd.f32 %v128, %v481
    %v483 = vpop.f32.mrb[0].mxu0
    %484 = vmatprep.mubr.f32.mxu0 0.0
    %485 = vmatmul.mubr.f32.gmra.mrb[0].mxu0 %v101
    %v486 = vpop.f32.mrb[0].mxu0
    %v487 = vadd.f32 %v128, %v486
    %v488 = vpop.f32.mrb[0].mxu0
    %489 = vmatprep.mubr.f32.mxu0 0.0
    %490 = vmatmul.mubr.f32.gmra.mrb[0].mxu0 %v102
    %v491 = vpop.f32.mrb[0].mxu0
    %v492 = vadd.f32 %v128, %v491
    %v493 = vpop.f32.mrb[0].mxu0
    %494 = vmatprep.mubr.f32.mxu0 0.0
    %495 = vmatmul.mubr.f32.gmra.mrb[0].mxu0 %v103
    %v496 = vpop.f32.mrb[0].mxu0
    %v497 = vadd.f32 %v128, %v496
    %v498 = vpop.f32.mrb[0].mxu0
    %499 = vmatprep.mubr.f32.mxu0 0.0
    %500 = vmatmul.mubr.f32.gmra.mrb[0].mxu0 %v104
    %v501 = vpop.f32.mrb[0].mxu0
    %v502 = vadd.f32 %v128, %v501
    %v503 = vpop.f32.mrb[0].mxu0
    %504 = vmatprep.mubr.f32.mxu0 0.0
    %505 = vmatmul.mubr.f32.gmra.mrb[0].mxu0 %v105
    %v506 = vpop.f32.mrb[0].mxu0
    %v507 = vadd.f32 %v128, %v506
    %v508 = vpop.f32.mrb[0].mxu0
    %509 = vmatprep.mubr.f32.mxu0 0.0
    %510 = vmatmul.mubr.f32.gmra.mrb[0].mxu0 %v106
    %v511 = vpop.f32.mrb[0].mxu0
    %v512 = vadd.f32 %v128, %v511
    %v513 = vpop.f32.mrb[0].mxu0
    %514 = vdwg.mxu0
    %515 = vst [vmem:[#allocation7] sm:$0xff] %v197
    %516 = vst [vmem:[#allocation7 + $0x8] sm:$0xff] %v202
    %517 = vst [vmem:[#allocation7 + $0x10] sm:$0xff] %v207
    %518 = vst [vmem:[#allocation7 + $0x18] sm:$0xff] %v212
    %519 = vst [vmem:[#allocation7 + $0x20] sm:$0xff] %v217
    %520 = vst [vmem:[#allocation7 + $0x28] sm:$0xff] %v222
    %521 = vst [vmem:[#allocation7 + $0x30] sm:$0xff] %v227
    %522 = vst [vmem:[#allocation7 + $0x38] sm:$0xff] %v232
    %523 = vst [vmem:[#allocation7 + $0x40] sm:$0xff] %v237
    %524 = vst [vmem:[#allocation7 + $0x48] sm:$0xff] %v242
    %525 = vst [vmem:[#allocation7 + $0x50] sm:$0xff] %v247
    %526 = vst [vmem:[#allocation7 + $0x58] sm:$0xff] %v252
    %527 = vst [vmem:[#allocation7 + $0x60] sm:$0xff] %v257
    %528 = vst [vmem:[#allocation7 + $0x68] sm:$0xff] %v262
    %529 = vst [vmem:[#allocation7 + $0x70] sm:$0xff] %v267
    %530 = vst [vmem:[#allocation7 + $0x78] sm:$0xff] %v272
    %531 = vst [vmem:[#allocation7 + $0x80] sm:$0xff] %v277
    %532 = vst [vmem:[#allocation7 + $0x88] sm:$0xff] %v282
    %533 = vst [vmem:[#allocation7 + $0x90] sm:$0xff] %v287
    %534 = vst [vmem:[#allocation7 + $0x98] sm:$0xff] %v292
    %535 = vst [vmem:[#allocation7 + $0xa0] sm:$0xff] %v297
    %536 = vst [vmem:[#allocation7 + $0xa8] sm:$0xff] %v302
    %537 = vst [vmem:[#allocation7 + $0xb0] sm:$0xff] %v307
    %538 = vst [vmem:[#allocation7 + $0xb8] sm:$0xff] %v312
    %539 = vst [vmem:[#allocation7 + $0xc0] sm:$0xff] %v317
    %540 = vst [vmem:[#allocation7 + $0xc8] sm:$0xff] %v322
    %541 = vst [vmem:[#allocation7 + $0xd0] sm:$0xff] %v327
    %542 = vst [vmem:[#allocation7 + $0xd8] sm:$0xff] %v332
    %543 = vst [vmem:[#allocation7 + $0xe0] sm:$0xff] %v337
    %544 = vst [vmem:[#allocation7 + $0xe8] sm:$0xff] %v342
    %545 = vst [vmem:[#allocation7 + $0xf0] sm:$0xff] %v347
    %546 = vst [vmem:[#allocation7 + $0xf8] sm:$0xff] %v352
    %547 = vst [vmem:[#allocation7 + $0x100] sm:$0xff] %v357
    %548 = vst [vmem:[#allocation7 + $0x108] sm:$0xff] %v362
    %549 = vst [vmem:[#allocation7 + $0x110] sm:$0xff] %v367
    %550 = vst [vmem:[#allocation7 + $0x118] sm:$0xff] %v372
    %551 = vst [vmem:[#allocation7 + $0x120] sm:$0xff] %v377
    %552 = vst [vmem:[#allocation7 + $0x128] sm:$0xff] %v382
    %553 = vst [vmem:[#allocation7 + $0x130] sm:$0xff] %v387
    %554 = vst [vmem:[#allocation7 + $0x138] sm:$0xff] %v392
    %555 = vst [vmem:[#allocation7 + $0x140] sm:$0xff] %v397
    %556 = vst [vmem:[#allocation7 + $0x148] sm:$0xff] %v402
    %557 = vst [vmem:[#allocation7 + $0x150] sm:$0xff] %v407
    %558 = vst [vmem:[#allocation7 + $0x158] sm:$0xff] %v412
    %559 = vst [vmem:[#allocation7 + $0x160] sm:$0xff] %v417
    %560 = vst [vmem:[#allocation7 + $0x168] sm:$0xff] %v422
    %561 = vst [vmem:[#allocation7 + $0x170] sm:$0xff] %v427
    %562 = vst [vmem:[#allocation7 + $0x178] sm:$0xff] %v432
    %563 = vst [vmem:[#allocation7 + $0x180] sm:$0xff] %v437
    %564 = vst [vmem:[#allocation7 + $0x188] sm:$0xff] %v442
    %565 = vst [vmem:[#allocation7 + $0x190] sm:$0xff] %v447
    %566 = vst [vmem:[#allocation7 + $0x198] sm:$0xff] %v452
    %567 = vst [vmem:[#allocation7 + $0x1a0] sm:$0xff] %v457
    %568 = vst [vmem:[#allocation7 + $0x1a8] sm:$0xff] %v462
    %569 = vst [vmem:[#allocation7 + $0x1b0] sm:$0xff] %v467
    %570 = vst [vmem:[#allocation7 + $0x1b8] sm:$0xff] %v472
    %571 = vst [vmem:[#allocation7 + $0x1c0] sm:$0xff] %v477
    %572 = vst [vmem:[#allocation7 + $0x1c8] sm:$0xff] %v482
    %573 = vst [vmem:[#allocation7 + $0x1d0] sm:$0xff] %v487
    %574 = vst [vmem:[#allocation7 + $0x1d8] sm:$0xff] %v492
    %575 = vst [vmem:[#allocation7 + $0x1e0] sm:$0xff] %v497
    %576 = vst [vmem:[#allocation7 + $0x1e8] sm:$0xff] %v502
    %577 = vst [vmem:[#allocation7 + $0x1f0] sm:$0xff] %v507
    %578 = vst [vmem:[#allocation7 + $0x1f8] sm:$0xff] %v512
    // Predicated region
    $region22: #{tpu_custom_call.1} parent=1 // pred_check
      _
    $region23: #{tpu_custom_call.1} parent=1 // pred_check_branch
      %580 = sbr.rel (0) target = $region25
    $region24: #{tpu_custom_call.1} parent=1 // pred_region
      %s582 = ssub.s32 8192, 8192
      %583 = vsyncadd [#allocation4], %s582
      %s584 = sshll.u32 [#allocation7], 4
      %s585 = int_to_ptr.vmem [resolvable:$true] %s584
      %590 = dma.vmem_to_hbm [thread:$0]  %s585, 8192, %s3, [#allocation4], 128, 128, 8
    $region25: #{tpu_custom_call.1} parent=1 // pred_fallthru
      _
    // Predicated region
    $region26: #{tpu_custom_call.1} parent=1 // pred_check
      _
    $region27: #{tpu_custom_call.1} parent=1 // pred_check_branch
      %592 = sbr.rel (0) target = $region29
    $region28: #{tpu_custom_call.1} parent=1 // pred_region
      %593 = dma.done [#allocation4], 8192
    $region29: #{tpu_custom_call.1} parent=1 // pred_fallthru
      _
    %594 = vsyncpa [#allocation3], 1
    %595 = vsyncpa [#allocation6], 1
    %596 = vsyncpa [#allocation4], 1

</llo_original>
